<compile_context>
chip_gen: v7x
topology: tpu7x:2x2x1
jax: 0.10.0
libtpu: 0.0.40
codegen_flags: <defaults>
</compile_context>

<pallas_src>
import functools

import jax
import jax.numpy as jnp
from jax.experimental import pallas as pl
from jax.experimental.pallas import tpu as pltpu


# ---------------------------------------------------------------------------
# chip introspection (robust fallbacks: 64 MiB VMEM / 1 TensorCore)
# ---------------------------------------------------------------------------
def _tpu_info():
    try:
        return pltpu.get_tpu_info()
    except Exception:
        return None


def _vmem_capacity_bytes():
    info = _tpu_info()
    if info is not None:
        for name in ("vmem_capacity_bytes", "vmem_bytes", "vmem_capacity"):
            v = getattr(info, name, None)
            if isinstance(v, int) and v > 0:
                return v
    return 64 << 20                     # conservative: v7x per-core capacity


def _num_tensorcores():
    info = _tpu_info()
    if info is not None:
        for name in ("num_cores", "num_tensorcores", "tensorcore_count",
                     "cores_per_chip"):
            v = getattr(info, name, None)
            if isinstance(v, int) and v > 0:
                return v
    try:
        kind = jax.devices()[0].device_kind.lower()
    except Exception:
        kind = ""
    return 2 if "v7" in kind else 1


def _vmem_limit(request_bytes):
    """Clamp the scoped-VMEM request to the chip's physical capacity."""
    cap = _vmem_capacity_bytes()
    hi = int(cap * 0.85)
    lo = min(16 << 20, hi)
    return int(min(max(int(request_bytes) + (4 << 20), lo), hi))


def _target_block_bytes():
    # 1-4 MiB per input block amortizes the ~0.35us/step grid overhead while
    # keeping double-buffered inputs + the resident (C,C) cov block in VMEM.
    # Halve the target on 64-MiB (v7x) parts.
    return (1 << 20) if _vmem_capacity_bytes() <= (64 << 20) else (2 << 20)


def _largest_divisor_leq(n, cap):
    for d in range(max(1, min(n, cap)), 0, -1):
        if n % d == 0:
            return d
    return 1


def _pick_lane_tile(C, L, itemsize, target_bytes, rows=1):
    """Full L if the block fits the byte target, else a multiple of 128."""
    per_lane = max(1, rows * C * itemsize)
    if per_lane * L <= target_bytes:
        return L
    tl = max(128, (target_bytes // per_lane) // 128 * 128)
    return min(tl, L)


# ---------------------------------------------------------------------------
# kernels
# ---------------------------------------------------------------------------
def _cov_kernel(x_ref, cov_ref, *, bn, tl, l_total, ragged, cast_bf16):
    """Accumulate bn rows of X_tile @ X_tile.T directly into the resident
    (1, C, C) f32 output block (no scratch accumulator, no final copy)."""
    ni = pl.program_id(1)
    li = pl.program_id(2)

    @pl.when(jnp.logical_and(ni == 0, li == 0))
    def _():
        cov_ref[...] = jnp.zeros_like(cov_ref)

    for i in range(bn):                           # static, bn is small
        x = x_ref[i]                              # (C, tl)
        if ragged:
            # Last lane tile is partial: OOB lanes of the block are undefined,
            # zero them before they reach the MXU (cheap VPU select).
            lane = jax.lax.broadcasted_iota(jnp.int32, x.shape, 1) + li * tl
            x = jnp.where(lane < l_total, x, jnp.zeros_like(x))
        if cast_bf16:
            x = x.astype(jnp.bfloat16)
        # Contract the lane axes of both operands on the MXU, f32 accumulate.
        # TODO(synk): verify via pl.lower_as_mlir whether Mosaic inserts a
        # per-tile vxpose here; only matters if the cov pass becomes MXU-bound
        # (very large C), where it would compete for the vex slots.
        cov_ref[0] += jax.lax.dot_general(
            x, x, dimension_numbers=(((1,), (1,)), ((), ())),
            preferred_element_type=jnp.float32)


def _proj_kernel(v_ref, x_ref, o_ref, *, bn, normalize):
    """o[row, 0, lane-tile] = v . X[row][:, lane-tile], bn rows per step."""
    v = v_ref[...]                                            # (1, C)
    for i in range(bn):                                       # static unrolled
        x = x_ref[i]                                          # (C, tl)
        p = jnp.dot(v, x, preferred_element_type=jnp.float32)  # (1, tl)
        if normalize:
            # v @ (X / ||col||) == (v @ X) / ||col|| -> only scale the (1, tl)
            # row; reciprocal on the EUP.  eps matches torch: 1/(||col||+1e-6).
            xf = x.astype(jnp.float32)
            norm = jnp.sqrt(jnp.sum(xf * xf, axis=0, keepdims=True))
            p = p * pl.reciprocal(norm + 1e-6, approx=True)
        o_ref[i] = p


# ---------------------------------------------------------------------------
# wrapper
# ---------------------------------------------------------------------------
def pca_project_net(features, n=0, normalize=False, *,
                    target_block_bytes=None, cov_bf16=None):
    """JAX/Pallas equivalent of PCAProjectNet.forward.  features: (N, C, L)."""
    N, C, L = features.shape
    K = N * L
    itemsize = jnp.dtype(features.dtype).itemsize
    target = target_block_bytes or _target_block_bytes()
    if cov_bf16 is None:
        cov_bf16 = (features.dtype == jnp.float32) and (C >= 256)

    # ---- pass 1: cov = X @ X.T, accumulated in the resident output block ----
    # 2-TC chips (v7x) split the reduction along N (no L padding / zero tiles);
    # single-TC chips (v5e/v6e) compute a single partial.
    parts = 2 if (_num_tensorcores() >= 2 and N >= 2 and N % 2 == 0) else 1
    n_rows = N // parts

    tl_cov = _pick_lane_tile(C, L, itemsize, target, rows=1)
    tiles_cov = pl.cdiv(L, tl_cov)
    ragged_cov = (L % tl_cov) != 0
    bn_cov = _largest_divisor_leq(
        n_rows, max(1, target // max(1, C * tl_cov * itemsize)))
    nb_cov = n_rows // bn_cov

    cov_vmem = 2 * bn_cov * C * tl_cov * itemsize + 2 * C * C * 4
    cov_partials = pl.pallas_call(
        functools.partial(_cov_kernel, bn=bn_cov, tl=tl_cov, l_total=L,
                          ragged=ragged_cov, cast_bf16=cov_bf16),
        out_shape=jax.ShapeDtypeStruct((parts, C, C), jnp.float32),
        grid_spec=pltpu.PrefetchScalarGridSpec(
            num_scalar_prefetch=0,
            grid=(parts, nb_cov, tiles_cov),
            in_specs=[pl.BlockSpec(
                (bn_cov, C, tl_cov),
                lambda p, ni, li: (p * nb_cov + ni, 0, li))],
            out_specs=pl.BlockSpec((1, C, C), lambda p, ni, li: (p, 0, 0)),
        ),
        compiler_params=pltpu.CompilerParams(
            dimension_semantics=("parallel", "arbitrary", "arbitrary"),
            vmem_limit_bytes=_vmem_limit(cov_vmem)),
    )(features)

    # 1/K applied here: eigenvectors are invariant to it, eigenvalues still
    # match the torch module.
    cov = cov_partials.sum(axis=0) / K
    # TODO(synk): for very large C (C*C*4 approaching VMEM, notably v7x's
    # 64 MiB) a row-blocked cov grid that re-reads X per row block is needed;
    # not implemented in this small-C default path.

    # ---- eigendecomposition (plain JAX glue) --------------------------------
    # TODO(synk): torch.eig (LAPACK geev) has no Pallas equivalent; cov is
    # symmetric PSD so eigh is used, taking the eigenvector of the (n+1)-th
    # largest eigenvalue (geev's ordering is undefined; final output is
    # invariant to the eigenvector sign thanks to the (max+min) sign fix).
    _, eigvec = jnp.linalg.eigh(cov)
    first_compo = eigvec[:, C - 1 - n].reshape(1, C).astype(jnp.float32)

    # ---- pass 2: projection, up to 8 batch rows per step --------------------
    bn_cap = max(1, target // max(1, C * 128 * itemsize))
    bn_proj = _largest_divisor_leq(N, min(8, bn_cap))
    tl_proj = _pick_lane_tile(C, L, itemsize, target, rows=bn_proj)
    tiles_proj = pl.cdiv(L, tl_proj)

    proj_vmem = (2 * bn_proj * C * tl_proj * itemsize
                 + 2 * bn_proj * tl_proj * 4 + 2 * C * 4)
    proj = pl.pallas_call(
        functools.partial(_proj_kernel, bn=bn_proj, normalize=normalize),
        out_shape=jax.ShapeDtypeStruct((N, 1, L), jnp.float32),
        grid_spec=pltpu.PrefetchScalarGridSpec(
            num_scalar_prefetch=0,
            grid=(N // bn_proj, tiles_proj),
            in_specs=[
                pl.BlockSpec((1, C), lambda ni, li: (0, 0)),
                pl.BlockSpec((bn_proj, C, tl_proj), lambda ni, li: (ni, 0, li)),
            ],
            out_specs=pl.BlockSpec((bn_proj, 1, tl_proj),
                                   lambda ni, li: (ni, 0, li)),
        ),
        compiler_params=pltpu.CompilerParams(
            dimension_semantics=("parallel", "parallel"),
            vmem_limit_bytes=_vmem_limit(proj_vmem)),
    )(first_compo, features)

    # ---- global sign flip: tiny scalar epilogue, fused by XLA ---------------
    # NOTE: matches torch exactly: (max+min)/|max+min| is NaN when max+min == 0.
    s = jnp.max(proj) + jnp.min(proj)
    return proj * (s / jnp.abs(s))


def _reference(features, n=0, normalize=False):
    """Pure-JAX replica of the PyTorch forward (verification only)."""
    N, C, L = features.shape
    k = N * L
    x = jnp.transpose(features, (1, 0, 2)).reshape(C, -1).astype(jnp.float32)
    cov = jnp.matmul(x, x.T, precision="highest") / k
    _, eigvec = jnp.linalg.eigh(cov)
    v = eigvec[:, C - 1 - n]
    if normalize:
        x = x / (jnp.sqrt(jnp.sum(x * x, axis=0, keepdims=True)) + 1e-6)
    proj = jnp.matmul(v[None, :], x, precision="highest").reshape(N, 1, L)
    s = proj.max() + proj.min()
    return proj * (s / jnp.abs(s))


if __name__ == "__main__":
    key = jax.random.PRNGKey(0)
    k1, k2, k3 = jax.random.split(key, 3)

    # Config 1: single lane tile, batched cov rows, no normalization.
    N1, C1, L1 = 2, 8, 256
    f1 = jax.random.normal(k1, (N1, C1, L1), dtype=jnp.float32) + 1.0
    out1 = jax.block_until_ready(pca_project_net(f1, n=0, normalize=False))
    ref1 = jax.block_until_ready(_reference(f1, n=0, normalize=False))
    assert out1.shape == (N1, 1, L1) and out1.dtype == jnp.float32
    assert bool(jnp.all(jnp.isfinite(out1)))
    assert bool(jnp.allclose(out1, ref1, rtol=2e-2, atol=2e-2))

    # Config 2: ragged lane tiling (L=400, tl forced to 128) + normalization.
    N2, C2, L2 = 3, 16, 400
    f2 = jax.random.normal(k2, (N2, C2, L2), dtype=jnp.float32) + 1.0
    out2 = jax.block_until_ready(
        pca_project_net(f2, n=0, normalize=True, target_block_bytes=8192))
    ref2 = jax.block_until_ready(_reference(f2, n=0, normalize=True))
    assert out2.shape == (N2, 1, L2) and out2.dtype == jnp.float32
    assert bool(jnp.all(jnp.isfinite(out2)))
    assert bool(jnp.allclose(out2, ref2, rtol=2e-2, atol=2e-2))

    # Config 3: 8-row batched projection + bf16 cov tiles (C >= 256).
    N3, C3, L3 = 8, 256, 512
    f3 = jax.random.normal(k3, (N3, C3, L3), dtype=jnp.float32) + 1.0
    out3 = jax.block_until_ready(pca_project_net(f3, n=0, normalize=False))
    ref3 = jax.block_until_ready(_reference(f3, n=0, normalize=False))
    assert out3.shape == (N3, 1, L3) and out3.dtype == jnp.float32
    assert bool(jnp.all(jnp.isfinite(out3)))
    assert bool(jnp.allclose(out3, ref3, rtol=3e-2, atol=3e-2))

    print("KERNEL_OK")
</pallas_src>

<mosaic_0001>
module attributes {stable_mosaic.version = 11 : i64} {
  func.func @_cov_kernel(%arg0: i32, %arg1: i32, %arg2: i32, %arg3: memref<2x8x256xf32, #tpu.memory_space<vmem>>, %arg4: memref<1x8x8xf32, #tpu.memory_space<vmem>>) attributes {dimension_semantics = [#tpu.dimension_semantics<parallel>, #tpu.dimension_semantics<arbitrary>, #tpu.dimension_semantics<arbitrary>], iteration_bounds = array<i64: 1, 1, 1>, scalar_prefetch = 0 : i64, scratch_operands = 0 : i64, tpu.core_type = #tpu.core_type<tc>, window_params = [{transform_indices = @transform_0, window_bounds = array<i64: 2, 8, 256>}, {transform_indices = @transform_1, window_bounds = array<i64: 1, 8, 8>}]} {
    %c0_i32 = arith.constant 0 : i32
    %0 = arith.cmpi eq, %arg1, %c0_i32 : i32
    %c0_i32_0 = arith.constant 0 : i32
    %1 = arith.cmpi eq, %arg2, %c0_i32_0 : i32
    %2 = arith.andi %0, %1 : i1
    %3 = arith.extui %2 : i1 to i32
    %c0_i32_1 = arith.constant 0 : i32
    %4 = arith.cmpi ne, %3, %c0_i32_1 : i32
    scf.if %4 {
      %cst_19 = arith.constant 0.000000e+00 : f32
      %23 = vector.broadcast %cst_19 : f32 to vector<1x8x8xf32>
      %c0_20 = arith.constant 0 : index
      %c0_21 = arith.constant 0 : index
      %c0_22 = arith.constant 0 : index
      %24 = vector.load %arg4[%c0_20, %c0_21, %c0_22] : memref<1x8x8xf32, #tpu.memory_space<vmem>>, vector<1x8x8xf32>
      tpu.vector_store %arg4[%c0_20, %c0_21, %c0_22], %23 {strides = array<i32>} : memref<1x8x8xf32, #tpu.memory_space<vmem>>, vector<1x8x8xf32>,
    } else {
    }
    %c0 = arith.constant 0 : index
    %c0_2 = arith.constant 0 : index
    %c0_3 = arith.constant 0 : index
    %5 = vector.load %arg3[%c0, %c0_2, %c0_3] : memref<2x8x256xf32, #tpu.memory_space<vmem>>, vector<1x8x256xf32>
    %6 = vector.shape_cast %5 : vector<1x8x256xf32> to vector<8x256xf32>
    %c0_4 = arith.constant 0 : index
    %c0_5 = arith.constant 0 : index
    %c0_6 = arith.constant 0 : index
    %7 = vector.load %arg4[%c0_4, %c0_5, %c0_6] : memref<1x8x8xf32, #tpu.memory_space<vmem>>, vector<1x8x8xf32>
    %8 = vector.shape_cast %7 : vector<1x8x8xf32> to vector<8x8xf32>
    %cst = arith.constant dense<0.000000e+00> : vector<8x8xf32>
    %9 = tpu.matmul %6, %6, %cst {dimension_numbers = #tpu.dot_dimension_numbers<[1], [1], [0], [0], [0, 0, 1, 0], [], []>} : vector<8x256xf32>, vector<8x256xf32>, vector<8x8xf32> -> vector<8x8xf32>
    %10 = arith.addf %8, %9 : vector<8x8xf32>
    %c0_7 = arith.constant 0 : index
    %c0_8 = arith.constant 0 : index
    %c0_9 = arith.constant 0 : index
    %11 = vector.load %arg4[%c0_7, %c0_8, %c0_9] : memref<1x8x8xf32, #tpu.memory_space<vmem>>, vector<1x8x8xf32>
    %12 = vector.shape_cast %11 : vector<1x8x8xf32> to vector<8x8xf32>
    %13 = vector.shape_cast %10 : vector<8x8xf32> to vector<1x8x8xf32>
    tpu.vector_store %arg4[%c0_7, %c0_8, %c0_9], %13 {strides = array<i32>} : memref<1x8x8xf32, #tpu.memory_space<vmem>>, vector<1x8x8xf32>,
    %c1 = arith.constant 1 : index
    %c0_10 = arith.constant 0 : index
    %c0_11 = arith.constant 0 : index
    %14 = vector.load %arg3[%c1, %c0_10, %c0_11] : memref<2x8x256xf32, #tpu.memory_space<vmem>>, vector<1x8x256xf32>
    %15 = vector.shape_cast %14 : vector<1x8x256xf32> to vector<8x256xf32>
    %c0_12 = arith.constant 0 : index
    %c0_13 = arith.constant 0 : index
    %c0_14 = arith.constant 0 : index
    %16 = vector.load %arg4[%c0_12, %c0_13, %c0_14] : memref<1x8x8xf32, #tpu.memory_space<vmem>>, vector<1x8x8xf32>
    %17 = vector.shape_cast %16 : vector<1x8x8xf32> to vector<8x8xf32>
    %cst_15 = arith.constant dense<0.000000e+00> : vector<8x8xf32>
    %18 = tpu.matmul %15, %15, %cst_15 {dimension_numbers = #tpu.dot_dimension_numbers<[1], [1], [0], [0], [0, 0, 1, 0], [], []>} : vector<8x256xf32>, vector<8x256xf32>, vector<8x8xf32> -> vector<8x8xf32>
    %19 = arith.addf %17, %18 : vector<8x8xf32>
    %c0_16 = arith.constant 0 : index
    %c0_17 = arith.constant 0 : index
    %c0_18 = arith.constant 0 : index
    %20 = vector.load %arg4[%c0_16, %c0_17, %c0_18] : memref<1x8x8xf32, #tpu.memory_space<vmem>>, vector<1x8x8xf32>
    %21 = vector.shape_cast %20 : vector<1x8x8xf32> to vector<8x8xf32>
    %22 = vector.shape_cast %19 : vector<8x8xf32> to vector<1x8x8xf32>
    tpu.vector_store %arg4[%c0_16, %c0_17, %c0_18], %22 {strides = array<i32>} : memref<1x8x8xf32, #tpu.memory_space<vmem>>, vector<1x8x8xf32>,
    return
  }
  func.func @transform_0(%arg0: i32, %arg1: i32, %arg2: i32) -> (i32, i32, i32) {
    %c1_i32 = arith.constant 1 : i32
    %0 = arith.muli %arg0, %c1_i32 : i32
    %1 = arith.addi %0, %arg1 : i32
    %c0_i32 = arith.constant 0 : i32
    %c0_i32_0 = arith.constant 0 : i32
    return %1, %c0_i32, %arg2 : i32, i32, i32
  }
  func.func @transform_1(%arg0: i32, %arg1: i32, %arg2: i32) -> (i32, i32, i32) {
    %c0_i32 = arith.constant 0 : i32
    %c0_i32_0 = arith.constant 0 : i32
    %c0_i32_1 = arith.constant 0 : i32
    return %arg0, %c0_i32, %c0_i32_0 : i32, i32, i32
  }
}

</mosaic_0001>

<llo_original>
// kernel: tpu_custom_call.1
$region0: #{tpu_custom_call.1}
  #allocation0 [shape = 'u32[]', space=smem, size = 0x4, offset = 0x4, fixed_abs, tag = 'smem constant byte address 0x4 - core index']
  #allocation1 [shape = 'u32[144,128]{1,0:T(1,128)}', space=vmem, size = 0x12000, scoped, tag = 'internal scratch']
  %s0 = inlined_call_operand.hbm [shape: f32[2,8,256], index: 0, kind: input, shape index: {}]
  %s1 = inlined_call_operand.hbm [shape: f32[1,8,8], index: 1, kind: output, shape index: {}]
  %s2 = sld [smem:[#allocation0]]
  $region22: #{tpu_custom_call.1} parent=0
    _
  %s4 = ssub.s32 1, %s2
  %s5 = scalar_select 0, %s4, %s2
  $region1: #{tpu_custom_call.1} parent=0
    #allocation2 [shape = 'u8[16384]{0}', space=vmem, size = 0x4000, scoped, tag = 'input window, operand 0, single buffered']
    #allocation3 [shape = 's32[1]{0}', space=sflag, size = 0x4, scoped, tag = 'scoped memory for tpu_custom_call.1']
    #allocation4 [shape = 's32[1]{0}', space=sflag, size = 0x4, scoped, tag = 'scoped memory for tpu_custom_call.1']
    #allocation5 [shape = 'u8[4096]{0}', space=vmem, size = 0x1000, scoped, tag = 'output window, operand 0, single buffered']
    %6 = vsyncpa [#allocation3], 0
    %7 = vsyncpa [#allocation4], 0
    // Predicated region
    $region2: #{tpu_custom_call.1} parent=1 // pred_check
      _
    $region3: #{tpu_custom_call.1} parent=1 // pred_check_branch
      %9 = sbr.rel (0) target = $region5
    $region4: #{tpu_custom_call.1} parent=1 // pred_region
      %s10 = sadd.s32 0, 0
      %s11 = smul.u32 2, %s10
      %s13 = ssub.s32 512, 512
      %14 = vsyncadd [#allocation3], %s13
      %s15 = smul.addr %s11, 2
      %s16 = smul.addr %s15, 128
      %s17 = scalar_lea.hbm %s0, %s16
      %s18 = sshll.u32 [#allocation2], 4
      %s19 = int_to_ptr.vmem [resolvable:$true] %s18
      %24 = dma.hbm_to_vmem [thread:$0]  %s17, 512, %s19, [#allocation3], 256, 256, 16
    $region5: #{tpu_custom_call.1} parent=1 // pred_fallthru
      _
    // Predicated region
    $region6: #{tpu_custom_call.1} parent=1 // pred_check
      _
    $region7: #{tpu_custom_call.1} parent=1 // pred_check_branch
      %26 = sbr.rel (0) target = $region9
    $region8: #{tpu_custom_call.1} parent=1 // pred_region
      %27 = dma.done [#allocation3], 512
    $region9: #{tpu_custom_call.1} parent=1 // pred_fallthru
      _
    %s28 = sadd.s32 0, 0
    %s29 = smul.u32 2, %s28
    %p30 = scmp.eq.s32.totalorder 0, 0
    %p31 = scmp.eq.s32.totalorder 0, 0
    %p32 = pnand %p30, %p31
    %p33 = pneg %p32
    // Predicated region
    $region10: #{tpu_custom_call.1} parent=1 // pred_check
      _
    $region11: #{tpu_custom_call.1} parent=1 // pred_check_branch
      %35 = sbr.rel (%p32) target = $region13
    $region12: #{tpu_custom_call.1} parent=1 // pred_region
      %vm36 = vcmask 64512
      %37 = vst.msk [vmem:[#allocation5] sm:$0xff] %vm36, 0.0
    $region13: #{tpu_custom_call.1} parent=1 // pred_fallthru
      _
    %v38 = vld [vmem:[#allocation2] sm:$0xff]
    %v39 = vld [vmem:[#allocation2 + $0x8] sm:$0xff]
    %v40 = vld [vmem:[#allocation5] sm:$0xff]
    %41 = vmatprep.subr.mxu0 %v39
    %42 = vmatpush1.xpose.msra.mxu0 %v38
    %43 = vmatprep.subr.mxu0 0.0
    %44 = vmatpush1.xpose.msra.mxu0 0.0
    %45 = vmatprep.subr.mxu0 0.0
    %46 = vmatpush1.xpose.msra.mxu0 0.0
    %47 = vmatprep.subr.mxu0 0.0
    %48 = vmatpush1.xpose.msra.mxu0 0.0
    %49 = vmatprep.subr.mxu0 0.0
    %50 = vmatpush1.xpose.msra.mxu0 0.0
    %51 = vmatprep.subr.mxu0 0.0
    %52 = vmatpush1.xpose.msra.mxu0 0.0
    %53 = vmatprep.subr.mxu0 0.0
    %54 = vmatpush1.xpose.msra.mxu0 0.0
    %55 = vmatprep.subr.mxu0 0.0
    %56 = vmatpush1.xpose.msra.mxu0 0.0
    %57 = vmatprep.subr.mxu0 0.0
    %58 = vmatpush1.xpose.msra.mxu0 0.0
    %59 = vmatprep.subr.mxu0 0.0
    %60 = vmatpush1.xpose.msra.mxu0 0.0
    %61 = vmatprep.subr.mxu0 0.0
    %62 = vmatpush1.xpose.msra.mxu0 0.0
    %63 = vmatprep.subr.mxu0 0.0
    %64 = vmatpush1.xpose.msra.mxu0 0.0
    %65 = vmatprep.subr.mxu0 0.0
    %66 = vmatpush1.xpose.msra.mxu0 0.0
    %67 = vmatprep.subr.mxu0 0.0
    %68 = vmatpush1.xpose.msra.mxu0 0.0
    %69 = vmatprep.subr.mxu0 0.0
    %70 = vmatpush1.xpose.msra.mxu0 0.0
    %71 = vmatprep.subr.mxu0 0.0
    %72 = vmatpush1.xpose.msra.mxu0 0.0
    %73 = vmatprep.subr.mxu0 0.0
    %74 = vmatpush1.xpose.msra.mxu0 0.0
    %75 = vmatprep.subr.mxu0 0.0
    %76 = vmatpush1.xpose.msra.mxu0 0.0
    %77 = vmatprep.subr.mxu0 0.0
    %78 = vmatpush1.xpose.msra.mxu0 0.0
    %79 = vmatprep.subr.mxu0 0.0
    %80 = vmatpush1.xpose.msra.mxu0 0.0
    %81 = vmatprep.subr.mxu0 0.0
    %82 = vmatpush1.xpose.msra.mxu0 0.0
    %83 = vmatprep.subr.mxu0 0.0
    %84 = vmatpush1.xpose.msra.mxu0 0.0
    %85 = vmatprep.subr.mxu0 0.0
    %86 = vmatpush1.xpose.msra.mxu0 0.0
    %87 = vmatprep.subr.mxu0 0.0
    %88 = vmatpush1.xpose.msra.mxu0 0.0
    %89 = vmatprep.subr.mxu0 0.0
    %90 = vmatpush1.xpose.msra.mxu0 0.0
    %91 = vmatprep.subr.mxu0 0.0
    %92 = vmatpush1.xpose.msra.mxu0 0.0
    %93 = vmatprep.subr.mxu0 0.0
    %94 = vmatpush1.xpose.msra.mxu0 0.0
    %95 = vmatprep.subr.mxu0 0.0
    %96 = vmatpush1.xpose.msra.mxu0 0.0
    %97 = vmatprep.subr.mxu0 0.0
    %98 = vmatpush1.xpose.msra.mxu0 0.0
    %99 = vmatprep.subr.mxu0 0.0
    %100 = vmatpush1.xpose.msra.mxu0 0.0
    %101 = vmatprep.subr.mxu0 0.0
    %102 = vmatpush1.xpose.msra.mxu0 0.0
    %103 = vmatprep.subr.mxu0 0.0
    %104 = vmatpush1.xpose.msra.mxu0 0.0
    %105 = vmatprep.mubr.f32.mxu0 %v39
    %106 = vmatmul.mubr.f32.gmra.mrb[0].mxu0 %v38
    %v107 = vpop.f32.mrb[0].mxu0
    %v108 = vadd.f32 0.0, %v107
    %v109 = vpop.f32.mrb[0].mxu0
    %110 = vdwg.mxu0
    %v111 = vadd.f32 %v40, %v108
    %vm112 = vcmask 64512
    %113 = vst.msk [vmem:[#allocation5] sm:$0xff] %vm112, %v111
    %s114 = scalar_lea.vmem [#allocation2], 16
    %v115 = vld [vmem:[%s114] sm:$0xff]
    %v116 = vld [vmem:[%s114 + $0x8] sm:$0xff]
    %v117 = vld [vmem:[#allocation5] sm:$0xff]
    %118 = vmatprep.subr.mxu0 %v116
    %119 = vmatpush1.xpose.msra.mxu0 %v115
    %120 = vmatprep.subr.mxu0 0.0
    %121 = vmatpush1.xpose.msra.mxu0 0.0
    %122 = vmatprep.subr.mxu0 0.0
    %123 = vmatpush1.xpose.msra.mxu0 0.0
    %124 = vmatprep.subr.mxu0 0.0
    %125 = vmatpush1.xpose.msra.mxu0 0.0
    %126 = vmatprep.subr.mxu0 0.0
    %127 = vmatpush1.xpose.msra.mxu0 0.0
    %128 = vmatprep.subr.mxu0 0.0
    %129 = vmatpush1.xpose.msra.mxu0 0.0
    %130 = vmatprep.subr.mxu0 0.0
    %131 = vmatpush1.xpose.msra.mxu0 0.0
    %132 = vmatprep.subr.mxu0 0.0
    %133 = vmatpush1.xpose.msra.mxu0 0.0
    %134 = vmatprep.subr.mxu0 0.0
    %135 = vmatpush1.xpose.msra.mxu0 0.0
    %136 = vmatprep.subr.mxu0 0.0
    %137 = vmatpush1.xpose.msra.mxu0 0.0
    %138 = vmatprep.subr.mxu0 0.0
    %139 = vmatpush1.xpose.msra.mxu0 0.0
    %140 = vmatprep.subr.mxu0 0.0
    %141 = vmatpush1.xpose.msra.mxu0 0.0
    %142 = vmatprep.subr.mxu0 0.0
    %143 = vmatpush1.xpose.msra.mxu0 0.0
    %144 = vmatprep.subr.mxu0 0.0
    %145 = vmatpush1.xpose.msra.mxu0 0.0
    %146 = vmatprep.subr.mxu0 0.0
    %147 = vmatpush1.xpose.msra.mxu0 0.0
    %148 = vmatprep.subr.mxu0 0.0
    %149 = vmatpush1.xpose.msra.mxu0 0.0
    %150 = vmatprep.subr.mxu0 0.0
    %151 = vmatpush1.xpose.msra.mxu0 0.0
    %152 = vmatprep.subr.mxu0 0.0
    %153 = vmatpush1.xpose.msra.mxu0 0.0
    %154 = vmatprep.subr.mxu0 0.0
    %155 = vmatpush1.xpose.msra.mxu0 0.0
    %156 = vmatprep.subr.mxu0 0.0
    %157 = vmatpush1.xpose.msra.mxu0 0.0
    %158 = vmatprep.subr.mxu0 0.0
    %159 = vmatpush1.xpose.msra.mxu0 0.0
    %160 = vmatprep.subr.mxu0 0.0
    %161 = vmatpush1.xpose.msra.mxu0 0.0
    %162 = vmatprep.subr.mxu0 0.0
    %163 = vmatpush1.xpose.msra.mxu0 0.0
    %164 = vmatprep.subr.mxu0 0.0
    %165 = vmatpush1.xpose.msra.mxu0 0.0
    %166 = vmatprep.subr.mxu0 0.0
    %167 = vmatpush1.xpose.msra.mxu0 0.0
    %168 = vmatprep.subr.mxu0 0.0
    %169 = vmatpush1.xpose.msra.mxu0 0.0
    %170 = vmatprep.subr.mxu0 0.0
    %171 = vmatpush1.xpose.msra.mxu0 0.0
    %172 = vmatprep.subr.mxu0 0.0
    %173 = vmatpush1.xpose.msra.mxu0 0.0
    %174 = vmatprep.subr.mxu0 0.0
    %175 = vmatpush1.xpose.msra.mxu0 0.0
    %176 = vmatprep.subr.mxu0 0.0
    %177 = vmatpush1.xpose.msra.mxu0 0.0
    %178 = vmatprep.subr.mxu0 0.0
    %179 = vmatpush1.xpose.msra.mxu0 0.0
    %180 = vmatprep.subr.mxu0 0.0
    %181 = vmatpush1.xpose.msra.mxu0 0.0
    %182 = vmatprep.mubr.f32.mxu0 %v116
    %183 = vmatmul.mubr.f32.gmra.mrb[0].mxu0 %v115
    %v184 = vpop.f32.mrb[0].mxu0
    %v185 = vadd.f32 0.0, %v184
    %v186 = vpop.f32.mrb[0].mxu0
    %187 = vdwg.mxu0
    %v188 = vadd.f32 %v117, %v185
    %189 = vst.msk [vmem:[#allocation5] sm:$0xff] %vm112, %v188
    // Predicated region
    $region14: #{tpu_custom_call.1} parent=1 // pred_check
      _
    $region15: #{tpu_custom_call.1} parent=1 // pred_check_branch
      %191 = sbr.rel (0) target = $region17
    $region16: #{tpu_custom_call.1} parent=1 // pred_region
      %s193 = ssub.s32 128, 128
      %194 = vsyncadd [#allocation4], %s193
      %s196 = sshll.u32 [#allocation5], 4
      %s197 = int_to_ptr.vmem [resolvable:$true] %s196
      %199 = dma.vmem_to_hbm [thread:$0]  %s197, 128, %s1, [#allocation4]
    $region17: #{tpu_custom_call.1} parent=1 // pred_fallthru
      _
    // Predicated region
    $region18: #{tpu_custom_call.1} parent=1 // pred_check
      _
    $region19: #{tpu_custom_call.1} parent=1 // pred_check_branch
      %201 = sbr.rel (0) target = $region21
    $region20: #{tpu_custom_call.1} parent=1 // pred_region
      %202 = dma.done [#allocation4], 128
    $region21: #{tpu_custom_call.1} parent=1 // pred_fallthru
      _
    %203 = vsyncpa [#allocation3], 1
    %204 = vsyncpa [#allocation4], 1

</llo_original>
